<compile_context>
chip_gen: v6e
topology: v6e:2x2x1
jax: 0.10.0
libtpu: 0.0.40
codegen_flags: <defaults>
</compile_context>

<pallas_src>
import jax
import jax.numpy as jnp
from jax.experimental import pallas as pl
from jax.experimental.pallas import tpu as pltpu


_VMEM_LIMIT_BYTES = 32 * 1024 * 1024       # explicit scoped-VMEM limit (safe on v5e/v6e/v7x)
_VMEM_PIPELINE_BUDGET = 24 * 1024 * 1024   # budget for the double-buffered input/output tiles


def _pos_enc_kernel(pi_ref, pj_ref, w1_ref, b1_ref, w2_ref, b2_ref, o_ref):
    # Elementwise diff in f32 (VPU); inputs may be bf16.
    d = pi_ref[...].astype(jnp.float32) - pj_ref[...].astype(jnp.float32)
    w1 = w1_ref[...]
    w2 = w2_ref[...]
    if w1.dtype != jnp.float32:           # optional bf16 MXU operands
        d = d.astype(w1.dtype)
    # Linear 1 + ReLU (MXU + VPU), block-diagonal folded weights, f32 accumulate.
    h = jnp.dot(d, w1, preferred_element_type=jnp.float32) + b1_ref[...]
    h = jnp.maximum(h, 0.0)
    if w2.dtype != jnp.float32:
        h = h.astype(w2.dtype)
    # Linear 2 (MXU), lane-dense (last dim == 128 when folding applies).
    out = jnp.dot(h, w2, preferred_element_type=jnp.float32) + b2_ref[...]
    o_ref[...] = out.astype(o_ref.dtype)


def _lane_pad(n):
    return max(((n + 127) // 128) * 128, 128)


def _positional_encoder_impl(pos_i, pos_j, w1f, b1f, w2f, b2f, *,
                             fold, C, H, O, block_n):
    assert pos_i.shape == pos_j.shape and pos_i.ndim == 2
    N = pos_i.shape[0]
    assert pos_i.shape[1] == C
    out_dtype = pos_i.dtype
    itemsize = jnp.dtype(out_dtype).itemsize

    # Only the fold-divisibility needs padding (<= fold-1 == 7 rows).  Block
    # raggedness is handled by a ceil grid + Pallas boundary masking: no
    # pad-to-block-multiple input copies, no output slice, in the common case.
    n_pad = (-N) % fold
    if n_pad:
        # TODO(synk): fully zero-copy path for N % fold != 0 (needs a masked
        # unfolded store for the tiny tail); this branch copies the inputs.
        pos_i = jnp.pad(pos_i, ((0, n_pad), (0, 0)))
        pos_j = jnp.pad(pos_j, ((0, n_pad), (0, 0)))
    Np = N + n_pad

    Cf, Hf, Of = fold * C, fold * H, fold * O
    rows = Np // fold
    pif = pos_i.reshape(rows, Cf)          # free row-major reshapes
    pjf = pos_j.reshape(rows, Cf)

    # ---- folded rows per grid step (brows, multiple of 8) -------------------
    brows = max(8, (block_n // fold // 8) * 8)                 # requested
    # VMEM budget: 2 inputs + 1 output tile, lane-padded in VMEM, double-buffered.
    per_row_bytes = (2 * _lane_pad(Cf) + _lane_pad(Of)) * itemsize * 2
    weight_bytes = 2 * sum(a.size * jnp.dtype(a.dtype).itemsize
                           for a in (w1f, b1f, w2f, b2f))
    brows_vmem = max(8, ((_VMEM_PIPELINE_BUDGET - weight_bytes)
                         // per_row_bytes // 8) * 8)
    brows = min(brows, brows_vmem)
    # Megacore (v7x): keep >= 2 grid steps whenever there is enough work to
    # split, so the "parallel" axis actually shards across both TensorCores.
    if rows > 2 * 8 and brows >= rows:
        brows = max(8, (((rows + 1) // 2 + 7) // 8) * 8)
    # Never allocate a tile bigger than the (8-rounded) problem.
    brows = min(brows, ((rows + 7) // 8) * 8)

    grid = (pl.cdiv(rows, brows),)

    cost = pl.CostEstimate(
        flops=2 * Np * (C * H + H * O),
        transcendentals=0,
        bytes_accessed=(2 * Np * C + Np * O) * itemsize,
    )

    out_f = pl.pallas_call(
        _pos_enc_kernel,
        out_shape=jax.ShapeDtypeStruct((rows, Of), out_dtype),
        grid_spec=pltpu.PrefetchScalarGridSpec(
            num_scalar_prefetch=0,
            grid=grid,
            in_specs=[
                pl.BlockSpec((brows, Cf), lambda i: (i, 0)),   # pos_i (folded)
                pl.BlockSpec((brows, Cf), lambda i: (i, 0)),   # pos_j (folded)
                pl.BlockSpec((Cf, Hf), lambda i: (0, 0)),      # w1 (VMEM-resident)
                pl.BlockSpec((1, Hf), lambda i: (0, 0)),       # b1
                pl.BlockSpec((Hf, Of), lambda i: (0, 0)),      # w2
                pl.BlockSpec((1, Of), lambda i: (0, 0)),       # b2
            ],
            out_specs=pl.BlockSpec((brows, Of), lambda i: (i, 0)),
        ),
        compiler_params=pltpu.CompilerParams(
            dimension_semantics=("parallel",),     # shards across TCs on v7x
            vmem_limit_bytes=_VMEM_LIMIT_BYTES,
        ),
        cost_estimate=cost,
    )(pif, pjf, w1f, b1f, w2f, b2f)

    out = out_f.reshape(Np, O)                      # free reshape back
    if n_pad:
        out = out[:N]
    return out


def make_positional_encoder(w1, b1, w2, b2, *, block_n=32768, matmul_dtype=None,
                            jit=True):
    """Fold the MLP params once and return a (jitted) (pos_i, pos_j) -> out callable.

    w1: [C, H]; b1: [H] or [1, H]; w2: [H, O]; b2: [O] or [1, O].
    block_n: points processed per grid step (sweepable; ~32768 is a good default).
    matmul_dtype: e.g. jnp.bfloat16 to run MXU operands in bf16 (f32 accumulate).
    """
    C, H = w1.shape
    O = w2.shape[1]
    # Fold consecutive rows into lanes so the output's last dim is exactly 128.
    fold = 128 // O if (0 < O < 128 and 128 % O == 0) else 1
    wd = matmul_dtype if matmul_dtype is not None else jnp.float32

    eye = jnp.eye(fold, dtype=jnp.float32)
    w1f = jnp.kron(eye, w1.astype(jnp.float32)).astype(wd)   # (fold*C, fold*H)
    w2f = jnp.kron(eye, w2.astype(jnp.float32)).astype(wd)   # (fold*H, fold*O)
    b1f = jnp.tile(b1.reshape(1, H).astype(jnp.float32), (1, fold))   # (1, fold*H)
    b2f = jnp.tile(b2.reshape(1, O).astype(jnp.float32), (1, fold))   # (1, fold*O)
    # Materialize now so folding never runs on the per-call path.
    w1f, b1f, w2f, b2f = jax.block_until_ready((w1f, b1f, w2f, b2f))

    def apply(pos_i, pos_j):
        return _positional_encoder_impl(pos_i, pos_j, w1f, b1f, w2f, b2f,
                                        fold=fold, C=C, H=H, O=O, block_n=block_n)

    return jax.jit(apply) if jit else apply


def _init_linear(key, fan_in, fan_out, dtype=jnp.float32):
    # PyTorch nn.Linear default init: U(-1/sqrt(fan_in), 1/sqrt(fan_in)),
    # stored pre-transposed as (in, out) so the kernel computes x @ W + b.
    kw, kb = jax.random.split(key)
    bound = 1.0 / (fan_in ** 0.5)
    w = jax.random.uniform(kw, (fan_in, fan_out), dtype, minval=-bound, maxval=bound)
    b = jax.random.uniform(kb, (1, fan_out), dtype, minval=-bound, maxval=bound)
    return w, b


if __name__ == "__main__":
    num_coords = 3
    hid_dim = 32
    output_dim = 16

    key = jax.random.PRNGKey(0)
    k_pi, k_pj, k_l1, k_l2 = jax.random.split(key, 4)

    w1, b1 = _init_linear(k_l1, num_coords, hid_dim)
    w2, b2 = _init_linear(k_l2, hid_dim, output_dim)

    def reference(pi, pj):
        d = pi - pj
        return jnp.maximum(d @ w1 + b1, 0.0) @ w2 + b2

    encoder = make_positional_encoder(w1, b1, w2, b2)                 # f32 MXU path
    encoder_bf16 = make_positional_encoder(w1, b1, w2, b2,
                                           matmul_dtype=jnp.bfloat16)  # bf16 MXU path

    # Case 1: aligned N, multi-step grid (megacore split keeps grid >= 2).
    N1 = 2048
    pi1 = jax.random.normal(k_pi, (N1, num_coords), jnp.float32)
    pj1 = jax.random.normal(k_pj, (N1, num_coords), jnp.float32)
    out1 = jax.block_until_ready(encoder(pi1, pj1))
    assert out1.shape == (N1, output_dim)
    assert jnp.allclose(out1, reference(pi1, pj1), atol=1e-5, rtol=1e-5), "mismatch (aligned)"

    # Case 2: block-ragged N (multiple of fold) -> partial last block, zero copies.
    N2 = 1000
    pi2 = jax.random.normal(jax.random.PRNGKey(1), (N2, num_coords), jnp.float32)
    pj2 = jax.random.normal(jax.random.PRNGKey(2), (N2, num_coords), jnp.float32)
    out2 = jax.block_until_ready(encoder(pi2, pj2))
    assert out2.shape == (N2, output_dim)
    assert jnp.allclose(out2, reference(pi2, pj2), atol=1e-5, rtol=1e-5), "mismatch (ragged blk)"

    # Case 3: fold-ragged N (N % 8 != 0) -> exercises the tiny pad/slice tail path.
    N3 = 125
    pi3 = jax.random.normal(jax.random.PRNGKey(3), (N3, num_coords), jnp.float32)
    pj3 = jax.random.normal(jax.random.PRNGKey(4), (N3, num_coords), jnp.float32)
    out3 = jax.block_until_ready(encoder(pi3, pj3))
    assert out3.shape == (N3, output_dim)
    assert jnp.allclose(out3, reference(pi3, pj3), atol=1e-5, rtol=1e-5), "mismatch (ragged fold)"

    # Case 4: bf16 MXU operands (looser tolerance by design).
    out4 = jax.block_until_ready(encoder_bf16(pi1, pj1))
    assert out4.shape == (N1, output_dim)
    assert jnp.allclose(out4, reference(pi1, pj1), atol=5e-2, rtol=5e-2), "mismatch (bf16)"

    print("KERNEL_OK")
</pallas_src>

<mosaic_0001>
module attributes {stable_mosaic.version = 11 : i64} {
  func.func @_pos_enc_kernel(%arg0: i32, %arg1: memref<128x24xf32, #tpu.memory_space<vmem>>, %arg2: memref<128x24xf32, #tpu.memory_space<vmem>>, %arg3: memref<24x256xf32, #tpu.memory_space<vmem>>, %arg4: memref<1x256xf32, #tpu.memory_space<vmem>>, %arg5: memref<256x128xf32, #tpu.memory_space<vmem>>, %arg6: memref<1x128xf32, #tpu.memory_space<vmem>>, %arg7: memref<128x128xf32, #tpu.memory_space<vmem>>) attributes {dimension_semantics = [#tpu.dimension_semantics<parallel>], iteration_bounds = array<i64: 2>, scalar_prefetch = 0 : i64, scratch_operands = 0 : i64, tpu.core_type = #tpu.core_type<tc>, window_params = [{transform_indices = @transform_0, window_bounds = array<i64: 128, 24>}, {transform_indices = @transform_1, window_bounds = array<i64: 128, 24>}, {pipeline_mode = #tpu.pipeline_mode<synchronous>, transform_indices = @transform_2, window_bounds = array<i64: 24, 256>}, {pipeline_mode = #tpu.pipeline_mode<synchronous>, transform_indices = @transform_3, window_bounds = array<i64: 1, 256>}, {pipeline_mode = #tpu.pipeline_mode<synchronous>, transform_indices = @transform_4, window_bounds = array<i64: 256, 128>}, {pipeline_mode = #tpu.pipeline_mode<synchronous>, transform_indices = @transform_5, window_bounds = array<i64: 1, 128>}, {transform_indices = @transform_6, window_bounds = array<i64: 128, 128>}]} {
    %c0 = arith.constant 0 : index
    %c0_0 = arith.constant 0 : index
    %0 = vector.load %arg1[%c0, %c0_0] : memref<128x24xf32, #tpu.memory_space<vmem>>, vector<128x24xf32>
    %c0_1 = arith.constant 0 : index
    %c0_2 = arith.constant 0 : index
    %1 = vector.load %arg2[%c0_1, %c0_2] : memref<128x24xf32, #tpu.memory_space<vmem>>, vector<128x24xf32>
    %2 = arith.subf %0, %1 : vector<128x24xf32>
    %c0_3 = arith.constant 0 : index
    %c0_4 = arith.constant 0 : index
    %3 = vector.load %arg3[%c0_3, %c0_4] : memref<24x256xf32, #tpu.memory_space<vmem>>, vector<24x256xf32>
    %c0_5 = arith.constant 0 : index
    %c0_6 = arith.constant 0 : index
    %4 = vector.load %arg5[%c0_5, %c0_6] : memref<256x128xf32, #tpu.memory_space<vmem>>, vector<256x128xf32>
    %cst = arith.constant dense<0.000000e+00> : vector<128x256xf32>
    %5 = tpu.matmul %2, %3, %cst {dimension_numbers = #tpu.dot_dimension_numbers<[1], [0], [0], [1], [0, 0, 1, 1], [], []>} : vector<128x24xf32>, vector<24x256xf32>, vector<128x256xf32> -> vector<128x256xf32>
    %c0_7 = arith.constant 0 : index
    %c0_8 = arith.constant 0 : index
    %6 = vector.load %arg4[%c0_7, %c0_8] : memref<1x256xf32, #tpu.memory_space<vmem>>, vector<1x256xf32>
    %7 = vector.broadcast %6 : vector<1x256xf32> to vector<128x256xf32>
    %8 = arith.addf %5, %7 : vector<128x256xf32>
    %cst_9 = arith.constant 0.000000e+00 : f32
    %9 = vector.broadcast %cst_9 : f32 to vector<128x256xf32>
    %10 = arith.maximumf %8, %9 : vector<128x256xf32>
    %cst_10 = arith.constant dense<0.000000e+00> : vector<128x128xf32>
    %11 = tpu.matmul %10, %4, %cst_10 {dimension_numbers = #tpu.dot_dimension_numbers<[1], [0], [0], [1], [0, 0, 1, 1], [], []>} : vector<128x256xf32>, vector<256x128xf32>, vector<128x128xf32> -> vector<128x128xf32>
    %c0_11 = arith.constant 0 : index
    %c0_12 = arith.constant 0 : index
    %12 = vector.load %arg6[%c0_11, %c0_12] : memref<1x128xf32, #tpu.memory_space<vmem>>, vector<1x128xf32>
    %13 = vector.broadcast %12 : vector<1x128xf32> to vector<128x128xf32>
    %14 = arith.addf %11, %13 : vector<128x128xf32>
    %c0_13 = arith.constant 0 : index
    %c0_14 = arith.constant 0 : index
    %15 = vector.load %arg7[%c0_13, %c0_14] : memref<128x128xf32, #tpu.memory_space<vmem>>, vector<128x128xf32>
    tpu.vector_store %arg7[%c0_13, %c0_14], %14 {strides = array<i32>} : memref<128x128xf32, #tpu.memory_space<vmem>>, vector<128x128xf32>,
    return
  }
  func.func @transform_0(%arg0: i32) -> (i32, i32) {
    %c0_i32 = arith.constant 0 : i32
    %c0_i32_0 = arith.constant 0 : i32
    return %arg0, %c0_i32 : i32, i32
  }
  func.func @transform_1(%arg0: i32) -> (i32, i32) {
    %c0_i32 = arith.constant 0 : i32
    %c0_i32_0 = arith.constant 0 : i32
    return %arg0, %c0_i32 : i32, i32
  }
  func.func @transform_2(%arg0: i32) -> (i32, i32) {
    %c0_i32 = arith.constant 0 : i32
    %c0_i32_0 = arith.constant 0 : i32
    %c0_i32_1 = arith.constant 0 : i32
    return %c0_i32, %c0_i32_0 : i32, i32
  }
  func.func @transform_3(%arg0: i32) -> (i32, i32) {
    %c0_i32 = arith.constant 0 : i32
    %c0_i32_0 = arith.constant 0 : i32
    %c0_i32_1 = arith.constant 0 : i32
    return %c0_i32, %c0_i32_0 : i32, i32
  }
  func.func @transform_4(%arg0: i32) -> (i32, i32) {
    %c0_i32 = arith.constant 0 : i32
    %c0_i32_0 = arith.constant 0 : i32
    %c0_i32_1 = arith.constant 0 : i32
    return %c0_i32, %c0_i32_0 : i32, i32
  }
  func.func @transform_5(%arg0: i32) -> (i32, i32) {
    %c0_i32 = arith.constant 0 : i32
    %c0_i32_0 = arith.constant 0 : i32
    %c0_i32_1 = arith.constant 0 : i32
    return %c0_i32, %c0_i32_0 : i32, i32
  }
  func.func @transform_6(%arg0: i32) -> (i32, i32) {
    %c0_i32 = arith.constant 0 : i32
    %c0_i32_0 = arith.constant 0 : i32
    return %arg0, %c0_i32 : i32, i32
  }
}

</mosaic_0001>

<llo_original>
// kernel: apply.1
$region0: #{apply.1}
  #allocation0 [shape = 'u32[]', space=smem, size = 0x4, offset = 0x4, fixed_abs, tag = 'smem constant byte address 0x4 - core index']
  #allocation1 [shape = 'u32[144,128]{1,0:T(1,128)}', space=vmem, size = 0x12000, scoped, tag = 'internal scratch']
  %s0 = inlined_call_operand.vmem [shape: f32[256,24], index: 0, kind: input, shape index: {}]
  %s1 = inlined_call_operand.vmem [shape: f32[256,24], index: 1, kind: input, shape index: {}]
  %s2 = inlined_call_operand.vmem [shape: f32[24,256], index: 2, kind: input, shape index: {}]
  %s3 = inlined_call_operand.vmem [shape: f32[1,256], index: 3, kind: input, shape index: {}]
  %s4 = inlined_call_operand.vmem [shape: f32[256,128], index: 4, kind: input, shape index: {}]
  %s5 = inlined_call_operand.vmem [shape: f32[1,128], index: 5, kind: input, shape index: {}]
  %s6 = inlined_call_operand.vmem [shape: f32[256,128], index: 6, kind: output, shape index: {}]
  %s7 = sld [smem:[#allocation0]]
  $region57: #{apply.1} parent=0
    _
  %s9 = ssub.s32 1, %s7
  %s10 = scalar_select 0, %s9, %s7
  loop: start=0, step=1, limit=4
  $region2: #{apply.1} parent=0 // loop_pre_header
    _
  $region3: #{apply.1} parent=0 // loop_header
    %s12 = sphi 0, %s16
    %p13 = scmp.ge.s32.totalorder %s12, 4
    %s22 = sphi 0, %s24
    %s25 = sphi 0, %s22
    %s26 = sphi 0, %s25
    %s42 = sphi 0, %s26
    %s48 = sphi 0, %s50
    %s51 = sphi 0, %s48
    %s52 = sphi 0, %s51
    %s68 = sphi 0, %s52
    %s72 = sphi 0, %s72
    %s74 = sphi 0, %s72
    %s75 = sphi 0, %s74
    %s89 = sphi 0, %s75
    %s93 = sphi 0, %s93
    %s95 = sphi 0, %s93
    %s96 = sphi 0, %s95
    %s110 = sphi 0, %s96
    %s114 = sphi 0, %s114
    %s116 = sphi 0, %s114
    %s117 = sphi 0, %s116
    %s131 = sphi 0, %s117
    %s135 = sphi 0, %s135
    %s137 = sphi 0, %s135
    %s138 = sphi 0, %s137
    %s152 = sphi 0, %s138
    %s158 = sphi 0, %s160
    %s161 = sphi 0, %s158
    %s162 = sphi 0, %s161
    %s178 = sphi 0, %s162
  $region4: #{apply.1} parent=0 // loop_header_branch
    %15 = sbr.rel (%p13) target = $region8
  $region5: #{apply.1} parent=0 // loop_body
    %s17 = ssub.s32 %s12, 1
    %s18 = ssub.s32 %s12, 2
    %s19 = sadd.s32 %s12, 1
    %s20 = ssub.s32 %s12, %s19
    %p21 = scmp.eq.s32.totalorder %s20, 0
    %s23 = sadd.s32 %s22, 1
    %s24 = scalar_select %p21, %s22, %s23
    %p27 = pneg %p21
    %p28 = scmp.eq.s32.totalorder %s12, 1
    %p29 = por %p27, %p28
    %p30 = scmp.ne.s32.totalorder %s22, %s25
    %p31 = scmp.eq.s32.totalorder %s12, 0
    %p32 = por %p30, %p31
    %p33 = scmp.ne.s32.totalorder %s22, %s25
    %p34 = scmp.eq.s32.totalorder %s17, 1
    %p35 = por %p33, %p34
    %p36 = scmp.ne.s32.totalorder %s25, %s26
    %p37 = scmp.eq.s32.totalorder %s17, 0
    %p38 = por %p36, %p37
    %p39 = scmp.ne.s32.totalorder %s25, %s26
    %p40 = scmp.eq.s32.totalorder %s18, 1
    %p41 = por %p39, %p40
    %p43 = scmp.ne.s32.totalorder %s26, %s42
    %p44 = scmp.eq.s32.totalorder %s18, 0
    %p45 = por %p43, %p44
    %s46 = ssub.s32 %s12, %s19
    %p47 = scmp.eq.s32.totalorder %s46, 0
    %s49 = sadd.s32 %s48, 1
    %s50 = scalar_select %p47, %s48, %s49
    %p53 = pneg %p47
    %p54 = scmp.eq.s32.totalorder %s12, 1
    %p55 = por %p53, %p54
    %p56 = scmp.ne.s32.totalorder %s48, %s51
    %p57 = scmp.eq.s32.totalorder %s12, 0
    %p58 = por %p56, %p57
    %p59 = scmp.ne.s32.totalorder %s48, %s51
    %p60 = scmp.eq.s32.totalorder %s17, 1
    %p61 = por %p59, %p60
    %p62 = scmp.ne.s32.totalorder %s51, %s52
    %p63 = scmp.eq.s32.totalorder %s17, 0
    %p64 = por %p62, %p63
    %p65 = scmp.ne.s32.totalorder %s51, %s52
    %p66 = scmp.eq.s32.totalorder %s18, 1
    %p67 = por %p65, %p66
    %p69 = scmp.ne.s32.totalorder %s52, %s68
    %p70 = scmp.eq.s32.totalorder %s18, 0
    %p71 = por %p69, %p70
    %s73 = sadd.s32 %s72, 1
    %p76 = scmp.eq.s32.totalorder %s12, 1
    %p77 = scmp.ne.s32.totalorder %s72, %s74
    %p78 = scmp.eq.s32.totalorder %s12, 0
    %p79 = por %p77, %p78
    %p80 = scmp.ne.s32.totalorder %s72, %s74
    %p81 = scmp.eq.s32.totalorder %s17, 1
    %p82 = por %p80, %p81
    %p83 = scmp.ne.s32.totalorder %s74, %s75
    %p84 = scmp.eq.s32.totalorder %s17, 0
    %p85 = por %p83, %p84
    %p86 = scmp.ne.s32.totalorder %s74, %s75
    %p87 = scmp.eq.s32.totalorder %s18, 1
    %p88 = por %p86, %p87
    %p90 = scmp.ne.s32.totalorder %s75, %s89
    %p91 = scmp.eq.s32.totalorder %s18, 0
    %p92 = por %p90, %p91
    %s94 = sadd.s32 %s93, 1
    %p97 = scmp.eq.s32.totalorder %s12, 1
    %p98 = scmp.ne.s32.totalorder %s93, %s95
    %p99 = scmp.eq.s32.totalorder %s12, 0
    %p100 = por %p98, %p99
    %p101 = scmp.ne.s32.totalorder %s93, %s95
    %p102 = scmp.eq.s32.totalorder %s17, 1
    %p103 = por %p101, %p102
    %p104 = scmp.ne.s32.totalorder %s95, %s96
    %p105 = scmp.eq.s32.totalorder %s17, 0
    %p106 = por %p104, %p105
    %p107 = scmp.ne.s32.totalorder %s95, %s96
    %p108 = scmp.eq.s32.totalorder %s18, 1
    %p109 = por %p107, %p108
    %p111 = scmp.ne.s32.totalorder %s96, %s110
    %p112 = scmp.eq.s32.totalorder %s18, 0
    %p113 = por %p111, %p112
    %s115 = sadd.s32 %s114, 1
    %p118 = scmp.eq.s32.totalorder %s12, 1
    %p119 = scmp.ne.s32.totalorder %s114, %s116
    %p120 = scmp.eq.s32.totalorder %s12, 0
    %p121 = por %p119, %p120
    %p122 = scmp.ne.s32.totalorder %s114, %s116
    %p123 = scmp.eq.s32.totalorder %s17, 1
    %p124 = por %p122, %p123
    %p125 = scmp.ne.s32.totalorder %s116, %s117
    %p126 = scmp.eq.s32.totalorder %s17, 0
    %p127 = por %p125, %p126
    %p128 = scmp.ne.s32.totalorder %s116, %s117
    %p129 = scmp.eq.s32.totalorder %s18, 1
    %p130 = por %p128, %p129
    %p132 = scmp.ne.s32.totalorder %s117, %s131
    %p133 = scmp.eq.s32.totalorder %s18, 0
    %p134 = por %p132, %p133
    %s136 = sadd.s32 %s135, 1
    %p139 = scmp.eq.s32.totalorder %s12, 1
    %p140 = scmp.ne.s32.totalorder %s135, %s137
    %p141 = scmp.eq.s32.totalorder %s12, 0
    %p142 = por %p140, %p141
    %p143 = scmp.ne.s32.totalorder %s135, %s137
    %p144 = scmp.eq.s32.totalorder %s17, 1
    %p145 = por %p143, %p144
    %p146 = scmp.ne.s32.totalorder %s137, %s138
    %p147 = scmp.eq.s32.totalorder %s17, 0
    %p148 = por %p146, %p147
    %p149 = scmp.ne.s32.totalorder %s137, %s138
    %p150 = scmp.eq.s32.totalorder %s18, 1
    %p151 = por %p149, %p150
    %p153 = scmp.ne.s32.totalorder %s138, %s152
    %p154 = scmp.eq.s32.totalorder %s18, 0
    %p155 = por %p153, %p154
    %s156 = ssub.s32 %s12, %s19
    %p157 = scmp.eq.s32.totalorder %s156, 0
    %s159 = sadd.s32 %s158, 1
    %s160 = scalar_select %p157, %s158, %s159
    %p163 = pneg %p157
    %p164 = scmp.eq.s32.totalorder %s12, 1
    %p165 = por %p163, %p164
    %p166 = scmp.ne.s32.totalorder %s158, %s161
    %p167 = scmp.eq.s32.totalorder %s12, 0
    %p168 = por %p166, %p167
    %p169 = scmp.ne.s32.totalorder %s158, %s161
    %p170 = scmp.eq.s32.totalorder %s17, 1
    %p171 = por %p169, %p170
    %p172 = scmp.ne.s32.totalorder %s161, %s162
    %p173 = scmp.eq.s32.totalorder %s17, 0
    %p174 = por %p172, %p173
    %p175 = scmp.ne.s32.totalorder %s161, %s162
    %p176 = scmp.eq.s32.totalorder %s18, 1
    %p177 = por %p175, %p176
    %p179 = scmp.ne.s32.totalorder %s162, %s178
    %p180 = scmp.eq.s32.totalorder %s18, 0
    %p181 = por %p179, %p180
    %p182 = scmp.le.s32.totalorder 1, %s12
    %p183 = scmp.lt.s32.totalorder %s12, 3
    %p184 = pnand %p182, %p183
    %p185 = pneg %p184
    // Predicated region
    $region9: #{apply.1} parent=5 // pred_check
      _
    $region10: #{apply.1} parent=5 // pred_check_branch
      %187 = sbr.rel (%p184) target = $region12
    $region11: #{apply.1} parent=5 // pred_region
      %s188 = ssub.s32 %s12, 1
      // Predicated region
      $region13: #{apply.1} parent=11 // pred_check
        %p189 = pneg %p85
      $region14: #{apply.1} parent=11 // pred_check_branch
        %191 = sbr.rel (%p189) target = $region16
      $region15: #{apply.1} parent=11 // pred_region
        _
      $region16: #{apply.1} parent=11 // pred_fallthru
        _
      // Predicated region
      $region17: #{apply.1} parent=11 // pred_check
        %p192 = pneg %p106
      $region18: #{apply.1} parent=11 // pred_check_branch
        %194 = sbr.rel (%p192) target = $region20
      $region19: #{apply.1} parent=11 // pred_region
        _
      $region20: #{apply.1} parent=11 // pred_fallthru
        _
      // Predicated region
      $region21: #{apply.1} parent=11 // pred_check
        %p195 = pneg %p127
      $region22: #{apply.1} parent=11 // pred_check_branch
        %197 = sbr.rel (%p195) target = $region24
      $region23: #{apply.1} parent=11 // pred_region
        _
      $region24: #{apply.1} parent=11 // pred_fallthru
        _
      // Predicated region
      $region25: #{apply.1} parent=11 // pred_check
        %p198 = pneg %p148
      $region26: #{apply.1} parent=11 // pred_check_branch
        %200 = sbr.rel (%p198) target = $region28
      $region27: #{apply.1} parent=11 // pred_region
        _
      $region28: #{apply.1} parent=11 // pred_fallthru
        _
    $region12: #{apply.1} parent=5 // pred_fallthru
      _
    %p201 = scmp.lt.s32.totalorder %s12, 2
    // Predicated region
    $region29: #{apply.1} parent=5 // pred_check
      %p202 = pneg %p201
    $region30: #{apply.1} parent=5 // pred_check_branch
      %204 = sbr.rel (%p202) target = $region32
    $region31: #{apply.1} parent=5 // pred_region
      // Predicated region
      $region33: #{apply.1} parent=31 // pred_check
        %p205 = pneg %p32
      $region34: #{apply.1} parent=31 // pred_check_branch
        %207 = sbr.rel (%p205) target = $region36
      $region35: #{apply.1} parent=31 // pred_region
        %s208 = smul.u32 16, %s12
        %p209 = scmp.lt.s32.totalorder %s208, 31
        %s210 = scalar_select %p209, %s208, 31
        %s211 = smul.addr %s210, 8
        %s212 = scalar_lea.vmem %s0, %s211
        %s213 = smul.u32 16, %s12
      $region36: #{apply.1} parent=31 // pred_fallthru
        _
      // Predicated region
      $region37: #{apply.1} parent=31 // pred_check
        %p214 = pneg %p58
      $region38: #{apply.1} parent=31 // pred_check_branch
        %216 = sbr.rel (%p214) target = $region40
      $region39: #{apply.1} parent=31 // pred_region
        %s217 = smul.u32 16, %s12
        %p218 = scmp.lt.s32.totalorder %s217, 31
        %s219 = scalar_select %p218, %s217, 31
        %s220 = smul.addr %s219, 8
        %s221 = scalar_lea.vmem %s1, %s220
        %s222 = smul.u32 16, %s12
      $region40: #{apply.1} parent=31 // pred_fallthru
        _
    $region32: #{apply.1} parent=5 // pred_fallthru
      _
    %p223 = scmp.le.s32.totalorder 1, %s12
    %p224 = scmp.lt.s32.totalorder %s12, 3
    %p225 = pnand %p223, %p224
    %p226 = pneg %p225
    // Predicated region
    $region41: #{apply.1} parent=5 // pred_check
      _
    $region42: #{apply.1} parent=5 // pred_check_branch
      %228 = sbr.rel (%p225) target = $region44
    $region43: #{apply.1} parent=5 // pred_region
      %s229 = ssub.s32 %s12, 1
      %s230 = smul.u32 16, %s17
      %p231 = scmp.lt.s32.totalorder %s230, 31
      %s232 = scalar_select %p231, %s230, 31
      %s233 = smul.addr %s232, 8
      %s234 = scalar_lea.vmem %s0, %s233
      %p235 = pneg %p38
      %p236 = pneg %p35
      %s237 = smul.u32 16, %s17
      %p238 = scmp.lt.s32.totalorder %s237, 31
      %s239 = scalar_select %p238, %s237, 31
      %s240 = smul.addr %s239, 8
      %s241 = scalar_lea.vmem %s1, %s240
      %p242 = pneg %p64
      %p243 = pneg %p61
      %p244 = pneg %p85
      %p245 = pneg %p82
      %p246 = pneg %p106
      %p247 = pneg %p103
      %p248 = pneg %p127
      %p249 = pneg %p124
      %p250 = pneg %p148
      %p251 = pneg %p145
      %p252 = pneg %p174
      %p253 = pneg %p171
      %s254 = smul.u32 16, %s17
      %p255 = scmp.lt.s32.totalorder %s254, 31
      %s256 = scalar_select %p255, %s254, 31
      %s257 = smul.addr %s256, 8
      %s258 = scalar_lea.vmem %s6, %s257
      %s259 = smul.u32 16, %s17
      %p260 = scmp.lt.s32.totalorder %s259, 31
      %s261 = scalar_select %p260, %s259, 31
      %s262 = smul.addr %s261, 8
      %s263 = scalar_lea.vmem %s0, %s262
      %s264 = smul.u32 16, %s17
      %s265 = smul.u32 16, %s17
      %p266 = scmp.lt.s32.totalorder %s265, 31
      %s267 = scalar_select %p266, %s265, 31
      %s268 = smul.addr %s267, 8
      %s269 = scalar_lea.vmem %s1, %s268
      %s270 = smul.u32 16, %s17
      %s271 = smul.u32 16, %s17
      %p272 = scmp.lt.s32.totalorder %s271, 31
      %s273 = scalar_select %p272, %s271, 31
      %s274 = smul.addr %s273, 8
      %s275 = scalar_lea.vmem %s6, %s274
      %s276 = smul.u32 16, %s17
      %v277 = vld [vmem:[%s263] sm:$0xff]
      %v278 = vld [vmem:[%s263 + $0x8] sm:$0xff]
      %v279 = vld [vmem:[%s263 + $0x10] sm:$0xff]
      %v280 = vld [vmem:[%s263 + $0x18] sm:$0xff]
      %v281 = vld [vmem:[%s263 + $0x20] sm:$0xff]
      %v282 = vld [vmem:[%s263 + $0x28] sm:$0xff]
      %v283 = vld [vmem:[%s263 + $0x30] sm:$0xff]
      %v284 = vld [vmem:[%s263 + $0x38] sm:$0xff]
      %v285 = vld [vmem:[%s263 + $0x40] sm:$0xff]
      %v286 = vld [vmem:[%s263 + $0x48] sm:$0xff]
      %v287 = vld [vmem:[%s263 + $0x50] sm:$0xff]
      %v288 = vld [vmem:[%s263 + $0x58] sm:$0xff]
      %v289 = vld [vmem:[%s263 + $0x60] sm:$0xff]
      %v290 = vld [vmem:[%s263 + $0x68] sm:$0xff]
      %v291 = vld [vmem:[%s263 + $0x70] sm:$0xff]
      %v292 = vld [vmem:[%s263 + $0x78] sm:$0xff]
      %v293 = vld [vmem:[%s269] sm:$0xff]
      %v294 = vld [vmem:[%s269 + $0x8] sm:$0xff]
      %v295 = vld [vmem:[%s269 + $0x10] sm:$0xff]
      %v296 = vld [vmem:[%s269 + $0x18] sm:$0xff]
      %v297 = vld [vmem:[%s269 + $0x20] sm:$0xff]
      %v298 = vld [vmem:[%s269 + $0x28] sm:$0xff]
      %v299 = vld [vmem:[%s269 + $0x30] sm:$0xff]
      %v300 = vld [vmem:[%s269 + $0x38] sm:$0xff]
      %v301 = vld [vmem:[%s269 + $0x40] sm:$0xff]
      %v302 = vld [vmem:[%s269 + $0x48] sm:$0xff]
      %v303 = vld [vmem:[%s269 + $0x50] sm:$0xff]
      %v304 = vld [vmem:[%s269 + $0x58] sm:$0xff]
      %v305 = vld [vmem:[%s269 + $0x60] sm:$0xff]
      %v306 = vld [vmem:[%s269 + $0x68] sm:$0xff]
      %v307 = vld [vmem:[%s269 + $0x70] sm:$0xff]
      %v308 = vld [vmem:[%s269 + $0x78] sm:$0xff]
      %v309 = vsub.f32 %v277, %v293
      %v310 = vsub.f32 %v278, %v294
      %v311 = vsub.f32 %v279, %v295
      %v312 = vsub.f32 %v280, %v296
      %v313 = vsub.f32 %v281, %v297
      %v314 = vsub.f32 %v282, %v298
      %v315 = vsub.f32 %v283, %v299
      %v316 = vsub.f32 %v284, %v300
      %v317 = vsub.f32 %v285, %v301
      %v318 = vsub.f32 %v286, %v302
      %v319 = vsub.f32 %v287, %v303
      %v320 = vsub.f32 %v288, %v304
      %v321 = vsub.f32 %v289, %v305
      %v322 = vsub.f32 %v290, %v306
      %v323 = vsub.f32 %v291, %v307
      %v324 = vsub.f32 %v292, %v308
      %v325 = vld [vmem:[%s2] sm:$0xff]
      %v326 = vld [vmem:[%s2 + $0x8] sm:$0xff]
      %v327 = vld [vmem:[%s2 + $0x10] sm:$0xff]
      %v328 = vld [vmem:[%s2 + $0x18] sm:$0xff]
      %v329 = vld [vmem:[%s2 + $0x20] sm:$0xff]
      %v330 = vld [vmem:[%s2 + $0x28] sm:$0xff]
      %v331 = vld [vmem:[%s4] sm:$0xff]
      %v332 = vld [vmem:[%s4 + $0x8] sm:$0xff]
      %v333 = vld [vmem:[%s4 + $0x10] sm:$0xff]
      %v334 = vld [vmem:[%s4 + $0x18] sm:$0xff]
      %v335 = vld [vmem:[%s4 + $0x20] sm:$0xff]
      %v336 = vld [vmem:[%s4 + $0x28] sm:$0xff]
      %v337 = vld [vmem:[%s4 + $0x30] sm:$0xff]
      %v338 = vld [vmem:[%s4 + $0x38] sm:$0xff]
      %v339 = vld [vmem:[%s4 + $0x40] sm:$0xff]
      %v340 = vld [vmem:[%s4 + $0x48] sm:$0xff]
      %v341 = vld [vmem:[%s4 + $0x50] sm:$0xff]
      %v342 = vld [vmem:[%s4 + $0x58] sm:$0xff]
      %v343 = vld [vmem:[%s4 + $0x60] sm:$0xff]
      %v344 = vld [vmem:[%s4 + $0x68] sm:$0xff]
      %v345 = vld [vmem:[%s4 + $0x70] sm:$0xff]
      %v346 = vld [vmem:[%s4 + $0x78] sm:$0xff]
      %v347 = vld [vmem:[%s4 + $0x80] sm:$0xff]
      %v348 = vld [vmem:[%s4 + $0x88] sm:$0xff]
      %v349 = vld [vmem:[%s4 + $0x90] sm:$0xff]
      %v350 = vld [vmem:[%s4 + $0x98] sm:$0xff]
      %v351 = vld [vmem:[%s4 + $0xa0] sm:$0xff]
      %v352 = vld [vmem:[%s4 + $0xa8] sm:$0xff]
      %v353 = vld [vmem:[%s4 + $0xb0] sm:$0xff]
      %v354 = vld [vmem:[%s4 + $0xb8] sm:$0xff]
      %v355 = vld [vmem:[%s4 + $0xc0] sm:$0xff]
      %v356 = vld [vmem:[%s4 + $0xc8] sm:$0xff]
      %v357 = vld [vmem:[%s4 + $0xd0] sm:$0xff]
      %v358 = vld [vmem:[%s4 + $0xd8] sm:$0xff]
      %v359 = vld [vmem:[%s4 + $0xe0] sm:$0xff]
      %v360 = vld [vmem:[%s4 + $0xe8] sm:$0xff]
      %v361 = vld [vmem:[%s4 + $0xf0] sm:$0xff]
      %v362 = vld [vmem:[%s4 + $0xf8] sm:$0xff]
      %v363 = vld [vmem:[%s3] sm:$0x3]
      %v365 = vlaneseq
      %v366 = vshrl.u32 %v365, 7
      %v367 = vsub.s32 0, %v366
      %v368 = vrot.slane %v363, %v367
      %v369 = vlaneseq
      %v370 = vshrl.u32 %v369, 7
      %v371 = vsub.s32 1, %v370
      %v372 = vrot.slane %v363, %v371
      %vm375 = vcmask 195584
      %v377 = vsel %vm375, %v309, 0
      %v380 = vsel %vm375, %v310, 0
      %v383 = vsel %vm375, %v311, 0
      %v386 = vsel %vm375, %v312, 0
      %v389 = vsel %vm375, %v313, 0
      %v392 = vsel %vm375, %v314, 0
      %v395 = vsel %vm375, %v315, 0
      %v398 = vsel %vm375, %v316, 0
      %v401 = vsel %vm375, %v317, 0
      %v404 = vsel %vm375, %v318, 0
      %v407 = vsel %vm375, %v319, 0
      %v410 = vsel %vm375, %v320, 0
      %v413 = vsel %vm375, %v321, 0
      %v416 = vsel %vm375, %v322, 0
      %v419 = vsel %vm375, %v323, 0
      %v422 = vsel %vm375, %v324, 0
      %424 = vmatprep.subr.mxu0 0.0
      %425 = vmatpush1.msra.mxu0 0.0
      %426 = vmatprep.subr.mxu0 0.0
      %427 = vmatpush1.msra.mxu0 0.0
      %428 = vmatprep.subr.mxu0 0.0
      %429 = vmatpush1.msra.mxu0 0.0
      %430 = vmatprep.subr.mxu0 0.0
      %431 = vmatpush1.msra.mxu0 0.0
      %432 = vmatprep.subr.mxu0 0.0
      %433 = vmatpush1.msra.mxu0 0.0
      %434 = vmatprep.subr.mxu0 0.0
      %435 = vmatpush1.msra.mxu0 0.0
      %436 = vmatprep.subr.mxu0 0.0
      %437 = vmatpush1.msra.mxu0 0.0
      %438 = vmatprep.subr.mxu0 0.0
      %439 = vmatpush1.msra.mxu0 0.0
      %440 = vmatprep.subr.mxu0 0.0
      %441 = vmatpush1.msra.mxu0 0.0
      %442 = vmatprep.subr.mxu0 0.0
      %443 = vmatpush1.msra.mxu0 0.0
      %444 = vmatprep.subr.mxu0 0.0
      %445 = vmatpush1.msra.mxu0 0.0
      %446 = vmatprep.subr.mxu0 0.0
      %447 = vmatpush1.msra.mxu0 0.0
      %448 = vmatprep.subr.mxu0 0.0
      %449 = vmatpush1.msra.mxu0 0.0
      %450 = vmatprep.subr.mxu0 %v330
      %451 = vmatpush1.msra.mxu0 %v329
      %452 = vmatprep.subr.mxu0 %v328
      %453 = vmatpush1.msra.mxu0 %v327
      %454 = vmatprep.subr.mxu0 %v326
      %455 = vmatpush1.msra.mxu0 %v325
      %456 = vmatprep.subr.mxu0 0.0
      %457 = vmatpush2.msra.mxu0 0.0
      %458 = vmatprep.subr.mxu0 0.0
      %459 = vmatpush2.msra.mxu0 0.0
      %460 = vmatprep.subr.mxu0 0.0
      %461 = vmatpush2.msra.mxu0 0.0
      %462 = vmatprep.subr.mxu0 0.0
      %463 = vmatpush2.msra.mxu0 0.0
      %464 = vmatprep.subr.mxu0 0.0
      %465 = vmatpush2.msra.mxu0 0.0
      %466 = vmatprep.subr.mxu0 0.0
      %467 = vmatpush2.msra.mxu0 0.0
      %468 = vmatprep.subr.mxu0 0.0
      %469 = vmatpush2.msra.mxu0 0.0
      %470 = vmatprep.subr.mxu0 0.0
      %471 = vmatpush2.msra.mxu0 0.0
      %472 = vmatprep.subr.mxu0 0.0
      %473 = vmatpush2.msra.mxu0 0.0
      %474 = vmatprep.subr.mxu0 0.0
      %475 = vmatpush2.msra.mxu0 0.0
      %476 = vmatprep.subr.mxu0 0.0
      %477 = vmatpush2.msra.mxu0 0.0
      %478 = vmatprep.subr.mxu0 0.0
      %479 = vmatpush2.msra.mxu0 0.0
      %480 = vmatprep.subr.mxu0 0.0
      %481 = vmatpush2.msra.mxu0 0.0
      %482 = vmatprep.subr.mxu0 0.0
      %483 = vmatpush2.msra.mxu0 0.0
      %484 = vmatprep.subr.mxu0 0.0
      %485 = vmatpush2.msra.mxu0 0.0
      %486 = vmatprep.subr.mxu0 0.0
      %487 = vmatpush2.msra.mxu0 0.0
      %488 = vmatprep.mubr.f32.mxu0 0.0
      %489 = vmatmul.mubr.f32.gmra.mxu0 %v377
      %v490 = vpop.f32.mrf.mxu0
      %v491 = vadd.f32 %v368, %v490
      %v492 = vpop.f32.mrf.mxu0
      %v493 = vadd.f32 %v372, %v492
      %494 = vmatprep.mubr.f32.mxu0 0.0
      %495 = vmatmul.mubr.f32.gmra.mxu0 %v380
      %v496 = vpop.f32.mrf.mxu0
      %v497 = vadd.f32 %v368, %v496
      %v498 = vpop.f32.mrf.mxu0
      %v499 = vadd.f32 %v372, %v498
      %500 = vmatprep.mubr.f32.mxu0 0.0
      %501 = vmatmul.mubr.f32.gmra.mxu0 %v383
      %v502 = vpop.f32.mrf.mxu0
      %v503 = vadd.f32 %v368, %v502
      %v504 = vpop.f32.mrf.mxu0
      %v505 = vadd.f32 %v372, %v504
      %506 = vmatprep.mubr.f32.mxu0 0.0
      %507 = vmatmul.mubr.f32.gmra.mxu0 %v386
      %v508 = vpop.f32.mrf.mxu0
      %v509 = vadd.f32 %v368, %v508
      %v510 = vpop.f32.mrf.mxu0
      %v511 = vadd.f32 %v372, %v510
      %512 = vmatprep.mubr.f32.mxu0 0.0
      %513 = vmatmul.mubr.f32.gmra.mxu0 %v389
      %v514 = vpop.f32.mrf.mxu0
      %v515 = vadd.f32 %v368, %v514
      %v516 = vpop.f32.mrf.mxu0
      %v517 = vadd.f32 %v372, %v516
      %518 = vmatprep.mubr.f32.mxu0 0.0
      %519 = vmatmul.mubr.f32.gmra.mxu0 %v392
      %v520 = vpop.f32.mrf.mxu0
      %v521 = vadd.f32 %v368, %v520
      %v522 = vpop.f32.mrf.mxu0
      %v523 = vadd.f32 %v372, %v522
      %524 = vmatprep.mubr.f32.mxu0 0.0
      %525 = vmatmul.mubr.f32.gmra.mxu0 %v395
      %v526 = vpop.f32.mrf.mxu0
      %v527 = vadd.f32 %v368, %v526
      %v528 = vpop.f32.mrf.mxu0
      %v529 = vadd.f32 %v372, %v528
      %530 = vmatprep.mubr.f32.mxu0 0.0
      %531 = vmatmul.mubr.f32.gmra.mxu0 %v398
      %v532 = vpop.f32.mrf.mxu0
      %v533 = vadd.f32 %v368, %v532
      %v534 = vpop.f32.mrf.mxu0
      %v535 = vadd.f32 %v372, %v534
      %536 = vmatprep.mubr.f32.mxu0 0.0
      %537 = vmatmul.mubr.f32.gmra.mxu0 %v401
      %v538 = vpop.f32.mrf.mxu0
      %v539 = vadd.f32 %v368, %v538
      %v540 = vpop.f32.mrf.mxu0
      %v541 = vadd.f32 %v372, %v540
      %542 = vmatprep.mubr.f32.mxu0 0.0
      %543 = vmatmul.mubr.f32.gmra.mxu0 %v404
      %v544 = vpop.f32.mrf.mxu0
      %v545 = vadd.f32 %v368, %v544
      %v546 = vpop.f32.mrf.mxu0
      %v547 = vadd.f32 %v372, %v546
      %548 = vmatprep.mubr.f32.mxu0 0.0
      %549 = vmatmul.mubr.f32.gmra.mxu0 %v407
      %v550 = vpop.f32.mrf.mxu0
      %v551 = vadd.f32 %v368, %v550
      %v552 = vpop.f32.mrf.mxu0
      %v553 = vadd.f32 %v372, %v552
      %554 = vmatprep.mubr.f32.mxu0 0.0
      %555 = vmatmul.mubr.f32.gmra.mxu0 %v410
      %v556 = vpop.f32.mrf.mxu0
      %v557 = vadd.f32 %v368, %v556
      %v558 = vpop.f32.mrf.mxu0
      %v559 = vadd.f32 %v372, %v558
      %560 = vmatprep.mubr.f32.mxu0 0.0
      %561 = vmatmul.mubr.f32.gmra.mxu0 %v413
      %v562 = vpop.f32.mrf.mxu0
      %v563 = vadd.f32 %v368, %v562
      %v564 = vpop.f32.mrf.mxu0
      %v565 = vadd.f32 %v372, %v564
      %566 = vmatprep.mubr.f32.mxu0 0.0
      %567 = vmatmul.mubr.f32.gmra.mxu0 %v416
      %v568 = vpop.f32.mrf.mxu0
      %v569 = vadd.f32 %v368, %v568
      %v570 = vpop.f32.mrf.mxu0
      %v571 = vadd.f32 %v372, %v570
      %572 = vmatprep.mubr.f32.mxu0 0.0
      %573 = vmatmul.mubr.f32.gmra.mxu0 %v419
      %v574 = vpop.f32.mrf.mxu0
      %v575 = vadd.f32 %v368, %v574
      %v576 = vpop.f32.mrf.mxu0
      %v577 = vadd.f32 %v372, %v576
      %578 = vmatprep.mubr.f32.mxu0 0.0
      %579 = vmatmul.mubr.f32.gmra.mxu0 %v422
      %v580 = vpop.f32.mrf.mxu0
      %v581 = vadd.f32 %v368, %v580
      %v582 = vpop.f32.mrf.mxu0
      %v583 = vadd.f32 %v372, %v582
      %584 = vdwg.mxu0
      %v585 = vmax.f32 %v491, 0.0
      %v586 = vmax.f32 %v493, 0.0
      %v587 = vmax.f32 %v497, 0.0
      %v588 = vmax.f32 %v499, 0.0
      %v589 = vmax.f32 %v503, 0.0
      %v590 = vmax.f32 %v505, 0.0
      %v591 = vmax.f32 %v509, 0.0
      %v592 = vmax.f32 %v511, 0.0
      %v593 = vmax.f32 %v515, 0.0
      %v594 = vmax.f32 %v517, 0.0
      %v595 = vmax.f32 %v521, 0.0
      %v596 = vmax.f32 %v523, 0.0
      %v597 = vmax.f32 %v527, 0.0
      %v598 = vmax.f32 %v529, 0.0
      %v599 = vmax.f32 %v533, 0.0
      %v600 = vmax.f32 %v535, 0.0
      %v601 = vmax.f32 %v539, 0.0
      %v602 = vmax.f32 %v541, 0.0
      %v603 = vmax.f32 %v545, 0.0
      %v604 = vmax.f32 %v547, 0.0
      %v605 = vmax.f32 %v551, 0.0
      %v606 = vmax.f32 %v553, 0.0
      %v607 = vmax.f32 %v557, 0.0
      %v608 = vmax.f32 %v559, 0.0
      %v609 = vmax.f32 %v563, 0.0
      %v610 = vmax.f32 %v565, 0.0
      %v611 = vmax.f32 %v569, 0.0
      %v612 = vmax.f32 %v571, 0.0
      %v613 = vmax.f32 %v575, 0.0
      %v614 = vmax.f32 %v577, 0.0
      %v615 = vmax.f32 %v581, 0.0
      %v616 = vmax.f32 %v583, 0.0
      %v617 = vld [vmem:[%s5] sm:$0x1]
      %v619 = vlaneseq
      %v620 = vshrl.u32 %v619, 7
      %v621 = vsub.s32 0, %v620
      %v622 = vrot.slane %v617, %v621
      %624 = vmatprep.subr.mxu0 0.0
      %625 = vmatpush1.msra.mxu0 %v346
      %626 = vmatprep.subr.mxu0 0.0
      %627 = vmatpush1.msra.mxu0 %v345
      %628 = vmatprep.subr.mxu0 0.0
      %629 = vmatpush1.msra.mxu0 %v344
      %630 = vmatprep.subr.mxu0 0.0
      %631 = vmatpush1.msra.mxu0 %v343
      %632 = vmatprep.subr.mxu0 0.0
      %633 = vmatpush1.msra.mxu0 %v342
      %634 = vmatprep.subr.mxu0 0.0
      %635 = vmatpush1.msra.mxu0 %v341
      %636 = vmatprep.subr.mxu0 0.0
      %637 = vmatpush1.msra.mxu0 %v340
      %638 = vmatprep.subr.mxu0 0.0
      %639 = vmatpush1.msra.mxu0 %v339
      %640 = vmatprep.subr.mxu0 0.0
      %641 = vmatpush1.msra.mxu0 %v338
      %642 = vmatprep.subr.mxu0 0.0
      %643 = vmatpush1.msra.mxu0 %v337
      %644 = vmatprep.subr.mxu0 0.0
      %645 = vmatpush1.msra.mxu0 %v336
      %646 = vmatprep.subr.mxu0 0.0
      %647 = vmatpush1.msra.mxu0 %v335
      %648 = vmatprep.subr.mxu0 0.0
      %649 = vmatpush1.msra.mxu0 %v334
      %650 = vmatprep.subr.mxu0 0.0
      %651 = vmatpush1.msra.mxu0 %v333
      %652 = vmatprep.subr.mxu0 0.0
      %653 = vmatpush1.msra.mxu0 %v332
      %654 = vmatprep.subr.mxu0 0.0
      %655 = vmatpush1.msra.mxu0 %v331
      %656 = vmatprep.subr.mxu0 0.0
      %657 = vmatpush2.msra.mxu0 %v362
      %658 = vmatprep.subr.mxu0 0.0
      %659 = vmatpush2.msra.mxu0 %v361
      %660 = vmatprep.subr.mxu0 0.0
      %661 = vmatpush2.msra.mxu0 %v360
      %662 = vmatprep.subr.mxu0 0.0
      %663 = vmatpush2.msra.mxu0 %v359
      %664 = vmatprep.subr.mxu0 0.0
      %665 = vmatpush2.msra.mxu0 %v358
      %666 = vmatprep.subr.mxu0 0.0
      %667 = vmatpush2.msra.mxu0 %v357
      %668 = vmatprep.subr.mxu0 0.0
      %669 = vmatpush2.msra.mxu0 %v356
      %670 = vmatprep.subr.mxu0 0.0
      %671 = vmatpush2.msra.mxu0 %v355
      %672 = vmatprep.subr.mxu0 0.0
      %673 = vmatpush2.msra.mxu0 %v354
      %674 = vmatprep.subr.mxu0 0.0
      %675 = vmatpush2.msra.mxu0 %v353
      %676 = vmatprep.subr.mxu0 0.0
      %677 = vmatpush2.msra.mxu0 %v352
      %678 = vmatprep.subr.mxu0 0.0
      %679 = vmatpush2.msra.mxu0 %v351
      %680 = vmatprep.subr.mxu0 0.0
      %681 = vmatpush2.msra.mxu0 %v350
      %682 = vmatprep.subr.mxu0 0.0
      %683 = vmatpush2.msra.mxu0 %v349
      %684 = vmatprep.subr.mxu0 0.0
      %685 = vmatpush2.msra.mxu0 %v348
      %686 = vmatprep.subr.mxu0 0.0
      %687 = vmatpush2.msra.mxu0 %v347
      %688 = vmatprep.mubr.f32.mxu0 %v586
      %689 = vmatmul.mubr.f32.gmra.mxu0 %v585
      %v690 = vpop.f32.mrf.mxu0
      %v691 = vadd.f32 %v622, %v690
      %v692 = vpop.f32.mrf.mxu0
      %693 = vmatprep.mubr.f32.mxu0 %v588
      %694 = vmatmul.mubr.f32.gmra.mxu0 %v587
      %v695 = vpop.f32.mrf.mxu0
      %v696 = vadd.f32 %v622, %v695
      %v697 = vpop.f32.mrf.mxu0
      %698 = vmatprep.mubr.f32.mxu0 %v590
      %699 = vmatmul.mubr.f32.gmra.mxu0 %v589
      %v700 = vpop.f32.mrf.mxu0
      %v701 = vadd.f32 %v622, %v700
      %v702 = vpop.f32.mrf.mxu0
      %703 = vmatprep.mubr.f32.mxu0 %v592
      %704 = vmatmul.mubr.f32.gmra.mxu0 %v591
      %v705 = vpop.f32.mrf.mxu0
      %v706 = vadd.f32 %v622, %v705
      %v707 = vpop.f32.mrf.mxu0
      %708 = vmatprep.mubr.f32.mxu0 %v594
      %709 = vmatmul.mubr.f32.gmra.mxu0 %v593
      %v710 = vpop.f32.mrf.mxu0
      %v711 = vadd.f32 %v622, %v710
      %v712 = vpop.f32.mrf.mxu0
      %713 = vmatprep.mubr.f32.mxu0 %v596
      %714 = vmatmul.mubr.f32.gmra.mxu0 %v595
      %v715 = vpop.f32.mrf.mxu0
      %v716 = vadd.f32 %v622, %v715
      %v717 = vpop.f32.mrf.mxu0
      %718 = vmatprep.mubr.f32.mxu0 %v598
      %719 = vmatmul.mubr.f32.gmra.mxu0 %v597
      %v720 = vpop.f32.mrf.mxu0
      %v721 = vadd.f32 %v622, %v720
      %v722 = vpop.f32.mrf.mxu0
      %723 = vmatprep.mubr.f32.mxu0 %v600
      %724 = vmatmul.mubr.f32.gmra.mxu0 %v599
      %v725 = vpop.f32.mrf.mxu0
      %v726 = vadd.f32 %v622, %v725
      %v727 = vpop.f32.mrf.mxu0
      %728 = vmatprep.mubr.f32.mxu0 %v602
      %729 = vmatmul.mubr.f32.gmra.mxu0 %v601
      %v730 = vpop.f32.mrf.mxu0
      %v731 = vadd.f32 %v622, %v730
      %v732 = vpop.f32.mrf.mxu0
      %733 = vmatprep.mubr.f32.mxu0 %v604
      %734 = vmatmul.mubr.f32.gmra.mxu0 %v603
      %v735 = vpop.f32.mrf.mxu0
      %v736 = vadd.f32 %v622, %v735
      %v737 = vpop.f32.mrf.mxu0
      %738 = vmatprep.mubr.f32.mxu0 %v606
      %739 = vmatmul.mubr.f32.gmra.mxu0 %v605
      %v740 = vpop.f32.mrf.mxu0
      %v741 = vadd.f32 %v622, %v740
      %v742 = vpop.f32.mrf.mxu0
      %743 = vmatprep.mubr.f32.mxu0 %v608
      %744 = vmatmul.mubr.f32.gmra.mxu0 %v607
      %v745 = vpop.f32.mrf.mxu0
      %v746 = vadd.f32 %v622, %v745
      %v747 = vpop.f32.mrf.mxu0
      %748 = vmatprep.mubr.f32.mxu0 %v610
      %749 = vmatmul.mubr.f32.gmra.mxu0 %v609
      %v750 = vpop.f32.mrf.mxu0
      %v751 = vadd.f32 %v622, %v750
      %v752 = vpop.f32.mrf.mxu0
      %753 = vmatprep.mubr.f32.mxu0 %v612
      %754 = vmatmul.mubr.f32.gmra.mxu0 %v611
      %v755 = vpop.f32.mrf.mxu0
      %v756 = vadd.f32 %v622, %v755
      %v757 = vpop.f32.mrf.mxu0
      %758 = vmatprep.mubr.f32.mxu0 %v614
      %759 = vmatmul.mubr.f32.gmra.mxu0 %v613
      %v760 = vpop.f32.mrf.mxu0
      %v761 = vadd.f32 %v622, %v760
      %v762 = vpop.f32.mrf.mxu0
      %763 = vmatprep.mubr.f32.mxu0 %v616
      %764 = vmatmul.mubr.f32.gmra.mxu0 %v615
      %v765 = vpop.f32.mrf.mxu0
      %v766 = vadd.f32 %v622, %v765
      %v767 = vpop.f32.mrf.mxu0
      %768 = vdwg.mxu0
      %769 = vst [vmem:[%s275] sm:$0xff] %v691
      %770 = vst [vmem:[%s275 + $0x8] sm:$0xff] %v696
      %771 = vst [vmem:[%s275 + $0x10] sm:$0xff] %v701
      %772 = vst [vmem:[%s275 + $0x18] sm:$0xff] %v706
      %773 = vst [vmem:[%s275 + $0x20] sm:$0xff] %v711
      %774 = vst [vmem:[%s275 + $0x28] sm:$0xff] %v716
      %775 = vst [vmem:[%s275 + $0x30] sm:$0xff] %v721
      %776 = vst [vmem:[%s275 + $0x38] sm:$0xff] %v726
      %777 = vst [vmem:[%s275 + $0x40] sm:$0xff] %v731
      %778 = vst [vmem:[%s275 + $0x48] sm:$0xff] %v736
      %779 = vst [vmem:[%s275 + $0x50] sm:$0xff] %v741
      %780 = vst [vmem:[%s275 + $0x58] sm:$0xff] %v746
      %781 = vst [vmem:[%s275 + $0x60] sm:$0xff] %v751
      %782 = vst [vmem:[%s275 + $0x68] sm:$0xff] %v756
      %783 = vst [vmem:[%s275 + $0x70] sm:$0xff] %v761
      %784 = vst [vmem:[%s275 + $0x78] sm:$0xff] %v766
      %s785 = smul.u32 16, %s17
      %p786 = scmp.lt.s32.totalorder %s785, 31
      %s787 = scalar_select %p786, %s785, 31
      %s788 = smul.addr %s787, 8
      %s789 = scalar_lea.vmem %s6, %s788
      // Predicated region
      $region45: #{apply.1} parent=43 // pred_check
        %p790 = pneg %p171
      $region46: #{apply.1} parent=43 // pred_check_branch
        %792 = sbr.rel (%p790) target = $region48
      $region47: #{apply.1} parent=43 // pred_region
        %s793 = smul.u32 16, %s17
      $region48: #{apply.1} parent=43 // pred_fallthru
        _
    $region44: #{apply.1} parent=5 // pred_fallthru
      _
    %p794 = scmp.le.s32.totalorder 2, %s12
    // Predicated region
    $region49: #{apply.1} parent=5 // pred_check
      %p795 = pneg %p794
    $region50: #{apply.1} parent=5 // pred_check_branch
      %797 = sbr.rel (%p795) target = $region52
    $region51: #{apply.1} parent=5 // pred_region
      %s798 = ssub.s32 %s12, 2
      // Predicated region
      $region53: #{apply.1} parent=51 // pred_check
        %p799 = pneg %p177
      $region54: #{apply.1} parent=51 // pred_check_branch
        %801 = sbr.rel (%p799) target = $region56
      $region55: #{apply.1} parent=51 // pred_region
        %s802 = smul.u32 16, %s18
        %p803 = scmp.lt.s32.totalorder %s802, 31
        %s804 = scalar_select %p803, %s802, 31
        %s805 = smul.addr %s804, 8
        %s806 = scalar_lea.vmem %s6, %s805
      $region56: #{apply.1} parent=51 // pred_fallthru
        _
    $region52: #{apply.1} parent=5 // pred_fallthru
      _
  $region6: #{apply.1} parent=0 // loop_footer
    %s16 = sadd.s32 1, %s12
  $region7: #{apply.1} parent=0 // loop_footer_branch
    %11 = sbr.rel target = $region3
  $region8: #{apply.1} parent=0 // loop_exit
    _

</llo_original>
